<compile_context>
chip_gen: v6e
topology: v6e:2x2x1
jax: 0.10.0
libtpu: 0.0.40
codegen_flags: <defaults>
</compile_context>

<pallas_src>
import functools

import jax
import jax.numpy as jnp
from jax import lax
from jax.experimental import pallas as pl
from jax.experimental.pallas import tpu as pltpu


def _round_up(x, m):
    return ((x + m - 1) // m) * m


def _layernorm_kernel(x_ref, g_ref, b_ref, o_ref, *, eps, feat, feat_p):
    x = x_ref[...].astype(jnp.float32)                       # (R, Fp)

    if feat_p != feat:
        # Feature axis was zero-padded to a multiple of 128 in the wrapper;
        # mask padded lanes out of the statistics.
        lane = lax.broadcasted_iota(jnp.int32, x.shape, 1)
        valid = lane < feat
        x = jnp.where(valid, x, 0.0)

    # mean over the *true* feature count (padded lanes are zero, so sum is exact)
    mean = jnp.sum(x, axis=-1, keepdims=True) * (1.0 / feat)
    xc = x - mean
    if feat_p != feat:
        xc = jnp.where(valid, xc, 0.0)

    # PyTorch x.std(-1) uses Bessel's correction (divide by F-1).
    var = jnp.sum(xc * xc, axis=-1, keepdims=True) * (1.0 / (feat - 1))
    # One exact reciprocal per row (on the (R,1) array), then a broadcast mul:
    # avoids F per-element divides on the VPU/EUP.
    inv_std = 1.0 / (jnp.sqrt(var) + eps)                    # (R, 1)

    y = g_ref[...] * (xc * inv_std) + b_ref[...]
    o_ref[...] = y.astype(o_ref.dtype)


def layer_norm_pallas(x, a_2, b_2, *, eps=1e-6, block_rows=None,
                      vmem_limit_bytes=48 * 1024 * 1024):
    """LayerNorm over the last axis of x, matching the custom PyTorch module."""
    orig_shape = x.shape
    feat = orig_shape[-1]
    x2 = x.reshape(-1, feat)
    n = x2.shape[0]
    itemsize = jnp.dtype(x.dtype).itemsize

    # Lane-dense feature axis: pad to a multiple of 128, mask in-kernel.
    feat_p = _round_up(feat, 128)

    # Sublane alignment for the row tile: 8 for f32, 16 for bf16, 32 for 8-bit.
    row_align = max(8, 32 // itemsize)

    if block_rows is None:
        # Dtype-aware budget (~40 MiB total VMEM footprint per grid step):
        #   2x double-buffered input tile  -> 2 * itemsize bytes / elem
        #   2x double-buffered output tile -> 2 * itemsize bytes / elem
        #   ~3 f32 in-kernel intermediates -> 12 bytes / elem
        vmem_budget = 40 * 1024 * 1024
        bytes_per_row = feat_p * (4 * itemsize + 3 * 4)
        max_rows = max(row_align,
                       (vmem_budget // bytes_per_row) // row_align * row_align)
        # Keep at least 2 grid steps when possible so a v7x megacore can shard
        # the row-tile axis across its two TensorCores.
        half = max(row_align, _round_up((n + 1) // 2, row_align))
        block_rows = max(row_align, min(max_rows, half))
    else:
        block_rows = max(row_align, _round_up(block_rows, row_align))

    # Never drop rows: pad to a multiple of block_rows and slice afterwards.
    n_pad = _round_up(n, block_rows)
    grid = (n_pad // block_rows,)

    if n_pad != n or feat_p != feat:
        x2 = jnp.pad(x2, ((0, n_pad - n), (0, feat_p - feat)))

    g2 = a_2.reshape(1, feat).astype(jnp.float32)
    b2 = b_2.reshape(1, feat).astype(jnp.float32)
    if feat_p != feat:
        g2 = jnp.pad(g2, ((0, 0), (0, feat_p - feat)))
        b2 = jnp.pad(b2, ((0, 0), (0, feat_p - feat)))

    out = pl.pallas_call(
        functools.partial(_layernorm_kernel, eps=eps, feat=feat, feat_p=feat_p),
        grid_spec=pltpu.PrefetchScalarGridSpec(
            num_scalar_prefetch=0,
            grid=grid,
            in_specs=[
                pl.BlockSpec((block_rows, feat_p), lambda i: (i, 0)),  # x tile
                pl.BlockSpec((1, feat_p), lambda i: (0, 0)),           # a_2 (resident)
                pl.BlockSpec((1, feat_p), lambda i: (0, 0)),           # b_2 (resident)
            ],
            out_specs=pl.BlockSpec((block_rows, feat_p), lambda i: (i, 0)),
        ),
        out_shape=jax.ShapeDtypeStruct((n_pad, feat_p), x.dtype),
        compiler_params=pltpu.CompilerParams(
            dimension_semantics=("parallel",),        # row tiles are independent
            vmem_limit_bytes=vmem_limit_bytes,
        ),
    )(x2, g2, b2)

    if n_pad != n or feat_p != feat:
        out = out[:n, :feat]
    return out.reshape(orig_shape)


def layer_norm_ref(x, a_2, b_2, eps=1e-6):
    """Pure-JAX mirror of the PyTorch forward (unbiased std, eps on std)."""
    x32 = x.astype(jnp.float32)
    mean = jnp.mean(x32, axis=-1, keepdims=True)
    xc = x32 - mean
    var = jnp.sum(xc * xc, axis=-1, keepdims=True) / (x.shape[-1] - 1)
    std = jnp.sqrt(var)
    return (a_2 * (xc / (std + eps)) + b_2).astype(x.dtype)


if __name__ == "__main__":
    # Small transformer-ish shapes: (batch, seq, features), features lane-dense.
    batch, seq, features = 2, 64, 256
    eps = 1e-6

    key = jax.random.PRNGKey(0)
    kx, kg, kb = jax.random.split(key, 3)

    x = jax.random.normal(kx, (batch, seq, features), jnp.float32)
    # Module initializes a_2=ones, b_2=zeros; perturb them so the scale/shift
    # path is actually exercised (forward semantics are identical).
    a_2 = 1.0 + 0.1 * jax.random.normal(kg, (features,), jnp.float32)
    b_2 = 0.1 * jax.random.normal(kb, (features,), jnp.float32)

    out = layer_norm_pallas(x, a_2, b_2, eps=eps)
    jax.block_until_ready(out)

    out_ref = layer_norm_ref(x, a_2, b_2, eps=eps)
    assert out.shape == x.shape
    assert jnp.allclose(out, out_ref, atol=1e-5, rtol=1e-5), "layernorm mismatch"

    # Also exercise a non-aligned shape (rows not divisible by the tile,
    # features not a multiple of 128) to check the padding/masking path.
    x_odd = jax.random.normal(kx, (3, 37, 192 + 5), jnp.float32)
    a_odd = 1.0 + 0.1 * jax.random.normal(kg, (197,), jnp.float32)
    b_odd = 0.1 * jax.random.normal(kb, (197,), jnp.float32)
    out_odd = layer_norm_pallas(x_odd, a_odd, b_odd, eps=eps)
    jax.block_until_ready(out_odd)
    assert jnp.allclose(out_odd, layer_norm_ref(x_odd, a_odd, b_odd, eps=eps),
                        atol=1e-5, rtol=1e-5), "layernorm mismatch (padded path)"

    print("KERNEL_OK")
</pallas_src>

<mosaic_0001>
module attributes {stable_mosaic.version = 11 : i64} {
  func.func @_layernorm_kernel(%arg0: i32, %arg1: memref<64x256xf32, #tpu.memory_space<vmem>>, %arg2: memref<1x256xf32, #tpu.memory_space<vmem>>, %arg3: memref<1x256xf32, #tpu.memory_space<vmem>>, %arg4: memref<64x256xf32, #tpu.memory_space<vmem>>) attributes {dimension_semantics = [#tpu.dimension_semantics<parallel>], iteration_bounds = array<i64: 2>, scalar_prefetch = 0 : i64, scratch_operands = 0 : i64, tpu.core_type = #tpu.core_type<tc>, window_params = [{transform_indices = @transform_0, window_bounds = array<i64: 64, 256>}, {pipeline_mode = #tpu.pipeline_mode<synchronous>, transform_indices = @transform_1, window_bounds = array<i64: 1, 256>}, {pipeline_mode = #tpu.pipeline_mode<synchronous>, transform_indices = @transform_2, window_bounds = array<i64: 1, 256>}, {transform_indices = @transform_3, window_bounds = array<i64: 64, 256>}]} {
    %c0 = arith.constant 0 : index
    %c0_0 = arith.constant 0 : index
    %0 = vector.load %arg1[%c0, %c0_0] : memref<64x256xf32, #tpu.memory_space<vmem>>, vector<64x256xf32>
    %cst = arith.constant dense<0.000000e+00> : vector<64xf32>
    %1 = vector.multi_reduction <add>, %0, %cst [1] : vector<64x256xf32> to vector<64xf32>
    %2 = vector.shape_cast %1 : vector<64xf32> to vector<64x1xf32>
    %cst_1 = arith.constant 3.906250e-03 : f32
    %3 = vector.broadcast %cst_1 : f32 to vector<64x1xf32>
    %4 = arith.mulf %2, %3 : vector<64x1xf32>
    %5 = vector.broadcast %4 : vector<64x1xf32> to vector<64x256xf32>
    %6 = arith.subf %0, %5 : vector<64x256xf32>
    %7 = arith.mulf %6, %6 : vector<64x256xf32>
    %cst_2 = arith.constant dense<0.000000e+00> : vector<64xf32>
    %8 = vector.multi_reduction <add>, %7, %cst_2 [1] : vector<64x256xf32> to vector<64xf32>
    %9 = vector.shape_cast %8 : vector<64xf32> to vector<64x1xf32>
    %cst_3 = arith.constant 0.00392156886 : f32
    %10 = vector.broadcast %cst_3 : f32 to vector<64x1xf32>
    %11 = arith.mulf %9, %10 : vector<64x1xf32>
    %12 = math.sqrt %11 : vector<64x1xf32>
    %cst_4 = arith.constant 9.99999997E-7 : f32
    %13 = vector.broadcast %cst_4 : f32 to vector<64x1xf32>
    %14 = arith.addf %12, %13 : vector<64x1xf32>
    %cst_5 = arith.constant 1.000000e+00 : f32
    %15 = vector.broadcast %cst_5 : f32 to vector<64x1xf32>
    %16 = arith.divf %15, %14 : vector<64x1xf32>
    %c0_6 = arith.constant 0 : index
    %c0_7 = arith.constant 0 : index
    %17 = vector.load %arg2[%c0_6, %c0_7] : memref<1x256xf32, #tpu.memory_space<vmem>>, vector<1x256xf32>
    %18 = vector.broadcast %16 : vector<64x1xf32> to vector<64x256xf32>
    %19 = arith.mulf %6, %18 : vector<64x256xf32>
    %20 = vector.broadcast %17 : vector<1x256xf32> to vector<64x256xf32>
    %21 = arith.mulf %20, %19 : vector<64x256xf32>
    %c0_8 = arith.constant 0 : index
    %c0_9 = arith.constant 0 : index
    %22 = vector.load %arg3[%c0_8, %c0_9] : memref<1x256xf32, #tpu.memory_space<vmem>>, vector<1x256xf32>
    %23 = vector.broadcast %22 : vector<1x256xf32> to vector<64x256xf32>
    %24 = arith.addf %21, %23 : vector<64x256xf32>
    %c0_10 = arith.constant 0 : index
    %c0_11 = arith.constant 0 : index
    %25 = vector.load %arg4[%c0_10, %c0_11] : memref<64x256xf32, #tpu.memory_space<vmem>>, vector<64x256xf32>
    tpu.vector_store %arg4[%c0_10, %c0_11], %24 {strides = array<i32>} : memref<64x256xf32, #tpu.memory_space<vmem>>, vector<64x256xf32>,
    return
  }
  func.func @transform_0(%arg0: i32) -> (i32, i32) {
    %c0_i32 = arith.constant 0 : i32
    %c0_i32_0 = arith.constant 0 : i32
    return %arg0, %c0_i32 : i32, i32
  }
  func.func @transform_1(%arg0: i32) -> (i32, i32) {
    %c0_i32 = arith.constant 0 : i32
    %c0_i32_0 = arith.constant 0 : i32
    %c0_i32_1 = arith.constant 0 : i32
    return %c0_i32, %c0_i32_0 : i32, i32
  }
  func.func @transform_2(%arg0: i32) -> (i32, i32) {
    %c0_i32 = arith.constant 0 : i32
    %c0_i32_0 = arith.constant 0 : i32
    %c0_i32_1 = arith.constant 0 : i32
    return %c0_i32, %c0_i32_0 : i32, i32
  }
  func.func @transform_3(%arg0: i32) -> (i32, i32) {
    %c0_i32 = arith.constant 0 : i32
    %c0_i32_0 = arith.constant 0 : i32
    return %arg0, %c0_i32 : i32, i32
  }
}

</mosaic_0001>

<llo_original>
// kernel: tpu_custom_call.1
$region0: #{tpu_custom_call.1}
  #allocation0 [shape = 'u32[]', space=smem, size = 0x4, offset = 0x4, fixed_abs, tag = 'smem constant byte address 0x4 - core index']
  #allocation1 [shape = 'u32[144,128]{1,0:T(1,128)}', space=vmem, size = 0x12000, scoped, tag = 'internal scratch']
  %s0 = inlined_call_operand.hbm [shape: f32[128,256], index: 0, kind: input, shape index: {}]
  %s1 = inlined_call_operand.hbm [shape: f32[1,256], index: 1, kind: input, shape index: {}]
  %s2 = inlined_call_operand.vmem [shape: f32[1,256], index: 2, kind: input, shape index: {}]
  %s3 = inlined_call_operand.hbm [shape: f32[128,256], index: 3, kind: output, shape index: {}]
  %s4 = sld [smem:[#allocation0]]
  $region53: #{tpu_custom_call.1} parent=0
    _
  %s6 = ssub.s32 1, %s4
  %s7 = scalar_select 0, %s6, %s4
  $region1: #{tpu_custom_call.1} parent=0
    #allocation2 [shape = 'u8[131072]{0}', space=vmem, size = 0x20000, scoped, tag = 'input window, operand 0']
    #allocation3 [shape = 's32[2]{0}', space=sflag, size = 0x8, scoped, tag = 'scoped memory for tpu_custom_call.1']
    #allocation4 [shape = 's32[2]{0}', space=sflag, size = 0x8, scoped, tag = 'scoped memory for tpu_custom_call.1']
    #allocation5 [shape = 'u8[1024]{0}', space=vmem, size = 0x400, scoped, tag = 'input window, operand 1, single buffered']
    #allocation6 [shape = 's32[1]{0}', space=sflag, size = 0x4, scoped, tag = 'scoped memory for tpu_custom_call.1']
    #allocation7 [shape = 'u8[131072]{0}', space=vmem, size = 0x20000, scoped, tag = 'output window, operand 0']
    %8 = vsyncpa [#allocation3], 0
    %s9 = scalar_lea.sflag [#allocation3], 1
    %10 = vsyncpa %s9, 0
    %11 = vsyncpa [#allocation6], 0
    %12 = vsyncpa [#allocation4], 0
    %s13 = scalar_lea.sflag [#allocation4], 1
    %14 = vsyncpa %s13, 0
    loop: start=0, step=1, limit=4
    $region2: #{tpu_custom_call.1} parent=1 // loop_pre_header
      _
    $region3: #{tpu_custom_call.1} parent=1 // loop_header
      %s16 = sphi 0, %s20
      %p17 = scmp.ge.s32.totalorder %s16, 4
      %s26 = sphi 0, %s28
      %s29 = sphi 0, %s26
      %s30 = sphi 0, %s29
      %s46 = sphi 0, %s30
      %s50 = sphi 0, %s50
      %s52 = sphi 0, %s50
      %s53 = sphi 0, %s52
      %s67 = sphi 0, %s53
      %s71 = sphi 0, %s71
      %s73 = sphi 0, %s71
      %s74 = sphi 0, %s73
      %s88 = sphi 0, %s74
      %s94 = sphi 0, %s96
      %s97 = sphi 0, %s94
      %s98 = sphi 0, %s97
      %s114 = sphi 0, %s98
    $region4: #{tpu_custom_call.1} parent=1 // loop_header_branch
      %19 = sbr.rel (%p17) target = $region8
    $region5: #{tpu_custom_call.1} parent=1 // loop_body
      %s21 = ssub.s32 %s16, 1
      %s22 = ssub.s32 %s16, 2
      %s23 = sadd.s32 %s16, 1
      %s24 = ssub.s32 %s16, %s23
      %p25 = scmp.eq.s32.totalorder %s24, 0
      %s27 = sadd.s32 %s26, 1
      %s28 = scalar_select %p25, %s26, %s27
      %p31 = pneg %p25
      %p32 = scmp.eq.s32.totalorder %s16, 1
      %p33 = por %p31, %p32
      %p34 = scmp.ne.s32.totalorder %s26, %s29
      %p35 = scmp.eq.s32.totalorder %s16, 0
      %p36 = por %p34, %p35
      %p37 = scmp.ne.s32.totalorder %s26, %s29
      %p38 = scmp.eq.s32.totalorder %s21, 1
      %p39 = por %p37, %p38
      %p40 = scmp.ne.s32.totalorder %s29, %s30
      %p41 = scmp.eq.s32.totalorder %s21, 0
      %p42 = por %p40, %p41
      %p43 = scmp.ne.s32.totalorder %s29, %s30
      %p44 = scmp.eq.s32.totalorder %s22, 1
      %p45 = por %p43, %p44
      %p47 = scmp.ne.s32.totalorder %s30, %s46
      %p48 = scmp.eq.s32.totalorder %s22, 0
      %p49 = por %p47, %p48
      %s51 = sadd.s32 %s50, 1
      %p54 = scmp.eq.s32.totalorder %s16, 1
      %p55 = scmp.ne.s32.totalorder %s50, %s52
      %p56 = scmp.eq.s32.totalorder %s16, 0
      %p57 = por %p55, %p56
      %p58 = scmp.ne.s32.totalorder %s50, %s52
      %p59 = scmp.eq.s32.totalorder %s21, 1
      %p60 = por %p58, %p59
      %p61 = scmp.ne.s32.totalorder %s52, %s53
      %p62 = scmp.eq.s32.totalorder %s21, 0
      %p63 = por %p61, %p62
      %p64 = scmp.ne.s32.totalorder %s52, %s53
      %p65 = scmp.eq.s32.totalorder %s22, 1
      %p66 = por %p64, %p65
      %p68 = scmp.ne.s32.totalorder %s53, %s67
      %p69 = scmp.eq.s32.totalorder %s22, 0
      %p70 = por %p68, %p69
      %s72 = sadd.s32 %s71, 1
      %p75 = scmp.eq.s32.totalorder %s16, 1
      %p76 = scmp.ne.s32.totalorder %s71, %s73
      %p77 = scmp.eq.s32.totalorder %s16, 0
      %p78 = por %p76, %p77
      %p79 = scmp.ne.s32.totalorder %s71, %s73
      %p80 = scmp.eq.s32.totalorder %s21, 1
      %p81 = por %p79, %p80
      %p82 = scmp.ne.s32.totalorder %s73, %s74
      %p83 = scmp.eq.s32.totalorder %s21, 0
      %p84 = por %p82, %p83
      %p85 = scmp.ne.s32.totalorder %s73, %s74
      %p86 = scmp.eq.s32.totalorder %s22, 1
      %p87 = por %p85, %p86
      %p89 = scmp.ne.s32.totalorder %s74, %s88
      %p90 = scmp.eq.s32.totalorder %s22, 0
      %p91 = por %p89, %p90
      %s92 = ssub.s32 %s16, %s23
      %p93 = scmp.eq.s32.totalorder %s92, 0
      %s95 = sadd.s32 %s94, 1
      %s96 = scalar_select %p93, %s94, %s95
      %p99 = pneg %p93
      %p100 = scmp.eq.s32.totalorder %s16, 1
      %p101 = por %p99, %p100
      %p102 = scmp.ne.s32.totalorder %s94, %s97
      %p103 = scmp.eq.s32.totalorder %s16, 0
      %p104 = por %p102, %p103
      %p105 = scmp.ne.s32.totalorder %s94, %s97
      %p106 = scmp.eq.s32.totalorder %s21, 1
      %p107 = por %p105, %p106
      %p108 = scmp.ne.s32.totalorder %s97, %s98
      %p109 = scmp.eq.s32.totalorder %s21, 0
      %p110 = por %p108, %p109
      %p111 = scmp.ne.s32.totalorder %s97, %s98
      %p112 = scmp.eq.s32.totalorder %s22, 1
      %p113 = por %p111, %p112
      %p115 = scmp.ne.s32.totalorder %s98, %s114
      %p116 = scmp.eq.s32.totalorder %s22, 0
      %p117 = por %p115, %p116
      %p118 = scmp.le.s32.totalorder 1, %s16
      %p119 = scmp.lt.s32.totalorder %s16, 3
      %p120 = pnand %p118, %p119
      %p121 = pneg %p120
      // Predicated region
      $region9: #{tpu_custom_call.1} parent=5 // pred_check
        _
      $region10: #{tpu_custom_call.1} parent=5 // pred_check_branch
        %123 = sbr.rel (%p120) target = $region12
      $region11: #{tpu_custom_call.1} parent=5 // pred_region
        %s124 = ssub.s32 %s16, 1
        // Predicated region
        $region13: #{tpu_custom_call.1} parent=11 // pred_check
          %p125 = pneg %p63
        $region14: #{tpu_custom_call.1} parent=11 // pred_check_branch
          %127 = sbr.rel (%p125) target = $region16
        $region15: #{tpu_custom_call.1} parent=11 // pred_region
          %s129 = ssub.s32 32, 32
          %130 = vsyncadd [#allocation6], %s129
          %s132 = sshll.u32 [#allocation5], 4
          %s133 = int_to_ptr.vmem [resolvable:$true] %s132
          %135 = dma.hbm_to_vmem [thread:$0]  %s1, 32, %s133, [#allocation6]
        $region16: #{tpu_custom_call.1} parent=11 // pred_fallthru
          _
        // Predicated region
        $region17: #{tpu_custom_call.1} parent=11 // pred_check
          %p136 = pneg %p84
        $region18: #{tpu_custom_call.1} parent=11 // pred_check_branch
          %138 = sbr.rel (%p136) target = $region20
        $region19: #{tpu_custom_call.1} parent=11 // pred_region
          _
        $region20: #{tpu_custom_call.1} parent=11 // pred_fallthru
          _
      $region12: #{tpu_custom_call.1} parent=5 // pred_fallthru
        _
      %p139 = scmp.lt.s32.totalorder %s16, 2
      // Predicated region
      $region21: #{tpu_custom_call.1} parent=5 // pred_check
        %p140 = pneg %p139
      $region22: #{tpu_custom_call.1} parent=5 // pred_check_branch
        %142 = sbr.rel (%p140) target = $region24
      $region23: #{tpu_custom_call.1} parent=5 // pred_region
        // Predicated region
        $region25: #{tpu_custom_call.1} parent=23 // pred_check
          %p143 = pneg %p36
        $region26: #{tpu_custom_call.1} parent=23 // pred_check_branch
          %145 = sbr.rel (%p143) target = $region28
        $region27: #{tpu_custom_call.1} parent=23 // pred_region
          %s146 = sand.u32 %s26, 1
          %s147 = scalar_lea.sflag [#allocation3], %s146
          %s148 = sand.u32 %s26, 1
          %s149 = smul.addr %s148, 128
          %s150 = scalar_lea.vmem [#allocation2], %s149
          %s151 = smul.u32 8, %s16
          %s153 = ssub.s32 2048, 2048
          %154 = vsyncadd %s147, %s153
          %s155 = smul.addr %s151, 2
          %s156 = smul.addr %s155, 128
          %s157 = scalar_lea.hbm %s0, %s156
          %s158 = sshll.u32 %s150, 4
          %s159 = int_to_ptr.vmem [resolvable:$true] %s158
          %164 = dma.hbm_to_vmem [thread:$0]  %s157, 2048, %s159, %s147, 256, 256, 16
        $region28: #{tpu_custom_call.1} parent=23 // pred_fallthru
          _
      $region24: #{tpu_custom_call.1} parent=5 // pred_fallthru
        _
      %p165 = scmp.le.s32.totalorder 1, %s16
      %p166 = scmp.lt.s32.totalorder %s16, 3
      %p167 = pnand %p165, %p166
      %p168 = pneg %p167
      // Predicated region
      $region29: #{tpu_custom_call.1} parent=5 // pred_check
        _
      $region30: #{tpu_custom_call.1} parent=5 // pred_check_branch
        %170 = sbr.rel (%p167) target = $region32
      $region31: #{tpu_custom_call.1} parent=5 // pred_region
        %s171 = ssub.s32 %s16, 1
        %s172 = sand.u32 %s29, 1
        %s173 = scalar_lea.sflag [#allocation3], %s172
        %s174 = sand.u32 %s29, 1
        %s175 = smul.addr %s174, 128
        %s176 = scalar_lea.vmem [#allocation2], %s175
        // Predicated region
        $region33: #{tpu_custom_call.1} parent=31 // pred_check
          %p177 = pneg %p42
        $region34: #{tpu_custom_call.1} parent=31 // pred_check_branch
          %179 = sbr.rel (%p177) target = $region36
        $region35: #{tpu_custom_call.1} parent=31 // pred_region
          %180 = dma.done %s173, 2048
        $region36: #{tpu_custom_call.1} parent=31 // pred_fallthru
          _
        // Predicated region
        $region37: #{tpu_custom_call.1} parent=31 // pred_check
          %p181 = pneg %p63
        $region38: #{tpu_custom_call.1} parent=31 // pred_check_branch
          %183 = sbr.rel (%p181) target = $region40
        $region39: #{tpu_custom_call.1} parent=31 // pred_region
          %184 = dma.done [#allocation6], 32
        $region40: #{tpu_custom_call.1} parent=31 // pred_fallthru
          _
        %s185 = sand.u32 %s29, 1
        %s186 = scalar_lea.sflag [#allocation3], %s185
        %s187 = sand.u32 %s29, 1
        %s188 = smul.addr %s187, 128
        %s189 = scalar_lea.vmem [#allocation2], %s188
        %p190 = pneg %p42
        %p191 = pneg %p39
        %p192 = pneg %p63
        %p193 = pneg %p60
        %p194 = pneg %p84
        %p195 = pneg %p81
        %p196 = pneg %p110
        %p197 = pneg %p107
        %s198 = sand.u32 %s97, 1
        %s199 = scalar_lea.sflag [#allocation4], %s198
        %s200 = sand.u32 %s97, 1
        %s201 = smul.addr %s200, 128
        %s202 = scalar_lea.vmem [#allocation7], %s201
        %s203 = smul.u32 8, %s21
        %s204 = smul.u32 8, %s21
        %v205 = vld [vmem:[%s176] sm:$0xff]
        %v206 = vld [vmem:[%s176 + $0x8] sm:$0xff]
        %v207 = vld [vmem:[%s176 + $0x10] sm:$0xff]
        %v208 = vld [vmem:[%s176 + $0x18] sm:$0xff]
        %v209 = vld [vmem:[%s176 + $0x20] sm:$0xff]
        %v210 = vld [vmem:[%s176 + $0x28] sm:$0xff]
        %v211 = vld [vmem:[%s176 + $0x30] sm:$0xff]
        %v212 = vld [vmem:[%s176 + $0x38] sm:$0xff]
        %v213 = vld [vmem:[%s176 + $0x40] sm:$0xff]
        %v214 = vld [vmem:[%s176 + $0x48] sm:$0xff]
        %v215 = vld [vmem:[%s176 + $0x50] sm:$0xff]
        %v216 = vld [vmem:[%s176 + $0x58] sm:$0xff]
        %v217 = vld [vmem:[%s176 + $0x60] sm:$0xff]
        %v218 = vld [vmem:[%s176 + $0x68] sm:$0xff]
        %v219 = vld [vmem:[%s176 + $0x70] sm:$0xff]
        %v220 = vld [vmem:[%s176 + $0x78] sm:$0xff]
        %v221 = vadd.f32 %v205, %v206
        %222 = vadd.xlane.f32.xlu0 %v221
        %v223 = vpop.xlane.xlu0 %222
        %v224 = vadd.f32 %v207, %v208
        %225 = vadd.xlane.f32.xlu0 %v224
        %v226 = vpop.xlane.xlu0 %225
        %v227 = vadd.f32 %v209, %v210
        %228 = vadd.xlane.f32.xlu0 %v227
        %v229 = vpop.xlane.xlu0 %228
        %v230 = vadd.f32 %v211, %v212
        %231 = vadd.xlane.f32.xlu0 %v230
        %v232 = vpop.xlane.xlu0 %231
        %v233 = vadd.f32 %v213, %v214
        %234 = vadd.xlane.f32.xlu0 %v233
        %v235 = vpop.xlane.xlu0 %234
        %v236 = vadd.f32 %v215, %v216
        %237 = vadd.xlane.f32.xlu0 %v236
        %v238 = vpop.xlane.xlu0 %237
        %v239 = vadd.f32 %v217, %v218
        %240 = vadd.xlane.f32.xlu0 %v239
        %v241 = vpop.xlane.xlu0 %240
        %v242 = vadd.f32 %v219, %v220
        %243 = vadd.xlane.f32.xlu0 %v242
        %v244 = vpop.xlane.xlu0 %243
        %v245 = vmul.f32 %v223, 0.00390625
        %v246 = vmul.f32 %v226, 0.00390625
        %v247 = vmul.f32 %v229, 0.00390625
        %v248 = vmul.f32 %v232, 0.00390625
        %v249 = vmul.f32 %v235, 0.00390625
        %v250 = vmul.f32 %v238, 0.00390625
        %v251 = vmul.f32 %v241, 0.00390625
        %v252 = vmul.f32 %v244, 0.00390625
        %v253 = vsub.f32 %v205, %v245
        %v254 = vsub.f32 %v206, %v245
        %v255 = vsub.f32 %v207, %v246
        %v256 = vsub.f32 %v208, %v246
        %v257 = vsub.f32 %v209, %v247
        %v258 = vsub.f32 %v210, %v247
        %v259 = vsub.f32 %v211, %v248
        %v260 = vsub.f32 %v212, %v248
        %v261 = vsub.f32 %v213, %v249
        %v262 = vsub.f32 %v214, %v249
        %v263 = vsub.f32 %v215, %v250
        %v264 = vsub.f32 %v216, %v250
        %v265 = vsub.f32 %v217, %v251
        %v266 = vsub.f32 %v218, %v251
        %v267 = vsub.f32 %v219, %v252
        %v268 = vsub.f32 %v220, %v252
        %v269 = vmul.f32 %v253, %v253
        %v270 = vmul.f32 %v254, %v254
        %v271 = vmul.f32 %v255, %v255
        %v272 = vmul.f32 %v256, %v256
        %v273 = vmul.f32 %v257, %v257
        %v274 = vmul.f32 %v258, %v258
        %v275 = vmul.f32 %v259, %v259
        %v276 = vmul.f32 %v260, %v260
        %v277 = vmul.f32 %v261, %v261
        %v278 = vmul.f32 %v262, %v262
        %v279 = vmul.f32 %v263, %v263
        %v280 = vmul.f32 %v264, %v264
        %v281 = vmul.f32 %v265, %v265
        %v282 = vmul.f32 %v266, %v266
        %v283 = vmul.f32 %v267, %v267
        %v284 = vmul.f32 %v268, %v268
        %v285 = vadd.f32 %v269, %v270
        %286 = vadd.xlane.f32.xlu0 %v285
        %v287 = vpop.xlane.xlu0 %286
        %v288 = vadd.f32 %v271, %v272
        %289 = vadd.xlane.f32.xlu0 %v288
        %v290 = vpop.xlane.xlu0 %289
        %v291 = vadd.f32 %v273, %v274
        %292 = vadd.xlane.f32.xlu0 %v291
        %v293 = vpop.xlane.xlu0 %292
        %v294 = vadd.f32 %v275, %v276
        %295 = vadd.xlane.f32.xlu0 %v294
        %v296 = vpop.xlane.xlu0 %295
        %v297 = vadd.f32 %v277, %v278
        %298 = vadd.xlane.f32.xlu0 %v297
        %v299 = vpop.xlane.xlu0 %298
        %v300 = vadd.f32 %v279, %v280
        %301 = vadd.xlane.f32.xlu0 %v300
        %v302 = vpop.xlane.xlu0 %301
        %v303 = vadd.f32 %v281, %v282
        %304 = vadd.xlane.f32.xlu0 %v303
        %v305 = vpop.xlane.xlu0 %304
        %v306 = vadd.f32 %v283, %v284
        %307 = vadd.xlane.f32.xlu0 %v306
        %v308 = vpop.xlane.xlu0 %307
        %v309 = vmul.f32 %v287, 0.003921569
        %v310 = vmul.f32 %v290, 0.003921569
        %v311 = vmul.f32 %v293, 0.003921569
        %v312 = vmul.f32 %v296, 0.003921569
        %v313 = vmul.f32 %v299, 0.003921569
        %v314 = vmul.f32 %v302, 0.003921569
        %v315 = vmul.f32 %v305, 0.003921569
        %v316 = vmul.f32 %v308, 0.003921569
        %v317 = vrsqrt.pop %v309
        %v318 = vmul.f32 %v309, %v317
        %vm319 = vcmp.eq.f32.partialorder %v309, inf
        %v320 = vsel %vm319, %v309, %v318
        %vm321 = vcmp.eq.f32.partialorder %v309, 0.0
        %v322 = vand.u32 %v309, 2147483648
        %v323 = vsel %vm321, %v322, %v320
        %v324 = vrsqrt.pop %v310
        %v325 = vmul.f32 %v310, %v324
        %vm326 = vcmp.eq.f32.partialorder %v310, inf
        %v327 = vsel %vm326, %v310, %v325
        %vm328 = vcmp.eq.f32.partialorder %v310, 0.0
        %v329 = vand.u32 %v310, 2147483648
        %v330 = vsel %vm328, %v329, %v327
        %v331 = vrsqrt.pop %v311
        %v332 = vmul.f32 %v311, %v331
        %vm333 = vcmp.eq.f32.partialorder %v311, inf
        %v334 = vsel %vm333, %v311, %v332
        %vm335 = vcmp.eq.f32.partialorder %v311, 0.0
        %v336 = vand.u32 %v311, 2147483648
        %v337 = vsel %vm335, %v336, %v334
        %v338 = vrsqrt.pop %v312
        %v339 = vmul.f32 %v312, %v338
        %vm340 = vcmp.eq.f32.partialorder %v312, inf
        %v341 = vsel %vm340, %v312, %v339
        %vm342 = vcmp.eq.f32.partialorder %v312, 0.0
        %v343 = vand.u32 %v312, 2147483648
        %v344 = vsel %vm342, %v343, %v341
        %v345 = vrsqrt.pop %v313
        %v346 = vmul.f32 %v313, %v345
        %vm347 = vcmp.eq.f32.partialorder %v313, inf
        %v348 = vsel %vm347, %v313, %v346
        %vm349 = vcmp.eq.f32.partialorder %v313, 0.0
        %v350 = vand.u32 %v313, 2147483648
        %v351 = vsel %vm349, %v350, %v348
        %v352 = vrsqrt.pop %v314
        %v353 = vmul.f32 %v314, %v352
        %vm354 = vcmp.eq.f32.partialorder %v314, inf
        %v355 = vsel %vm354, %v314, %v353
        %vm356 = vcmp.eq.f32.partialorder %v314, 0.0
        %v357 = vand.u32 %v314, 2147483648
        %v358 = vsel %vm356, %v357, %v355
        %v359 = vrsqrt.pop %v315
        %v360 = vmul.f32 %v315, %v359
        %vm361 = vcmp.eq.f32.partialorder %v315, inf
        %v362 = vsel %vm361, %v315, %v360
        %vm363 = vcmp.eq.f32.partialorder %v315, 0.0
        %v364 = vand.u32 %v315, 2147483648
        %v365 = vsel %vm363, %v364, %v362
        %v366 = vrsqrt.pop %v316
        %v367 = vmul.f32 %v316, %v366
        %vm368 = vcmp.eq.f32.partialorder %v316, inf
        %v369 = vsel %vm368, %v316, %v367
        %vm370 = vcmp.eq.f32.partialorder %v316, 0.0
        %v371 = vand.u32 %v316, 2147483648
        %v372 = vsel %vm370, %v371, %v369
        %v373 = vadd.f32 %v323, 1e-06
        %v374 = vadd.f32 %v330, 1e-06
        %v375 = vadd.f32 %v337, 1e-06
        %v376 = vadd.f32 %v344, 1e-06
        %v377 = vadd.f32 %v351, 1e-06
        %v378 = vadd.f32 %v358, 1e-06
        %v379 = vadd.f32 %v365, 1e-06
        %v380 = vadd.f32 %v372, 1e-06
        %v381 = vrcp.pop %v373
        %v382 = vmul.f32 1.0, %v381
        %v383 = vrcp.pop %v374
        %v384 = vmul.f32 1.0, %v383
        %v385 = vrcp.pop %v375
        %v386 = vmul.f32 1.0, %v385
        %v387 = vrcp.pop %v376
        %v388 = vmul.f32 1.0, %v387
        %v389 = vrcp.pop %v377
        %v390 = vmul.f32 1.0, %v389
        %v391 = vrcp.pop %v378
        %v392 = vmul.f32 1.0, %v391
        %v393 = vrcp.pop %v379
        %v394 = vmul.f32 1.0, %v393
        %v395 = vrcp.pop %v380
        %v396 = vmul.f32 1.0, %v395
        %v397 = vld [vmem:[#allocation5] sm:$0x3]
        %v398 = vmul.f32 %v253, %v382
        %v399 = vmul.f32 %v254, %v382
        %v400 = vmul.f32 %v255, %v384
        %v401 = vmul.f32 %v256, %v384
        %v402 = vmul.f32 %v257, %v386
        %v403 = vmul.f32 %v258, %v386
        %v404 = vmul.f32 %v259, %v388
        %v405 = vmul.f32 %v260, %v388
        %v406 = vmul.f32 %v261, %v390
        %v407 = vmul.f32 %v262, %v390
        %v408 = vmul.f32 %v263, %v392
        %v409 = vmul.f32 %v264, %v392
        %v410 = vmul.f32 %v265, %v394
        %v411 = vmul.f32 %v266, %v394
        %v412 = vmul.f32 %v267, %v396
        %v413 = vmul.f32 %v268, %v396
        %v415 = vlaneseq
        %v416 = vshrl.u32 %v415, 7
        %v417 = vsub.s32 0, %v416
        %v418 = vrot.slane %v397, %v417
        %v419 = vlaneseq
        %v420 = vshrl.u32 %v419, 7
        %v421 = vsub.s32 1, %v420
        %v422 = vrot.slane %v397, %v421
        %v425 = vmul.f32 %v418, %v398
        %v426 = vmul.f32 %v422, %v399
        %v427 = vmul.f32 %v418, %v400
        %v428 = vmul.f32 %v422, %v401
        %v429 = vmul.f32 %v418, %v402
        %v430 = vmul.f32 %v422, %v403
        %v431 = vmul.f32 %v418, %v404
        %v432 = vmul.f32 %v422, %v405
        %v433 = vmul.f32 %v418, %v406
        %v434 = vmul.f32 %v422, %v407
        %v435 = vmul.f32 %v418, %v408
        %v436 = vmul.f32 %v422, %v409
        %v437 = vmul.f32 %v418, %v410
        %v438 = vmul.f32 %v422, %v411
        %v439 = vmul.f32 %v418, %v412
        %v440 = vmul.f32 %v422, %v413
        %v441 = vld [vmem:[%s2] sm:$0x3]
        %v443 = vlaneseq
        %v444 = vshrl.u32 %v443, 7
        %v445 = vsub.s32 0, %v444
        %v446 = vrot.slane %v441, %v445
        %v447 = vlaneseq
        %v448 = vshrl.u32 %v447, 7
        %v449 = vsub.s32 1, %v448
        %v450 = vrot.slane %v441, %v449
        %v453 = vadd.f32 %v425, %v446
        %v454 = vadd.f32 %v426, %v450
        %v455 = vadd.f32 %v427, %v446
        %v456 = vadd.f32 %v428, %v450
        %v457 = vadd.f32 %v429, %v446
        %v458 = vadd.f32 %v430, %v450
        %v459 = vadd.f32 %v431, %v446
        %v460 = vadd.f32 %v432, %v450
        %v461 = vadd.f32 %v433, %v446
        %v462 = vadd.f32 %v434, %v450
        %v463 = vadd.f32 %v435, %v446
        %v464 = vadd.f32 %v436, %v450
        %v465 = vadd.f32 %v437, %v446
        %v466 = vadd.f32 %v438, %v450
        %v467 = vadd.f32 %v439, %v446
        %v468 = vadd.f32 %v440, %v450
        %469 = vst [vmem:[%s202] sm:$0xff] %v453
        %470 = vst [vmem:[%s202 + $0x8] sm:$0xff] %v454
        %471 = vst [vmem:[%s202 + $0x10] sm:$0xff] %v455
        %472 = vst [vmem:[%s202 + $0x18] sm:$0xff] %v456
        %473 = vst [vmem:[%s202 + $0x20] sm:$0xff] %v457
        %474 = vst [vmem:[%s202 + $0x28] sm:$0xff] %v458
        %475 = vst [vmem:[%s202 + $0x30] sm:$0xff] %v459
        %476 = vst [vmem:[%s202 + $0x38] sm:$0xff] %v460
        %477 = vst [vmem:[%s202 + $0x40] sm:$0xff] %v461
        %478 = vst [vmem:[%s202 + $0x48] sm:$0xff] %v462
        %479 = vst [vmem:[%s202 + $0x50] sm:$0xff] %v463
        %480 = vst [vmem:[%s202 + $0x58] sm:$0xff] %v464
        %481 = vst [vmem:[%s202 + $0x60] sm:$0xff] %v465
        %482 = vst [vmem:[%s202 + $0x68] sm:$0xff] %v466
        %483 = vst [vmem:[%s202 + $0x70] sm:$0xff] %v467
        %484 = vst [vmem:[%s202 + $0x78] sm:$0xff] %v468
        %s485 = sand.u32 %s97, 1
        %s486 = scalar_lea.sflag [#allocation4], %s485
        %s487 = sand.u32 %s97, 1
        %s488 = smul.addr %s487, 128
        %s489 = scalar_lea.vmem [#allocation7], %s488
        // Predicated region
        $region41: #{tpu_custom_call.1} parent=31 // pred_check
          %p490 = pneg %p107
        $region42: #{tpu_custom_call.1} parent=31 // pred_check_branch
          %492 = sbr.rel (%p490) target = $region44
        $region43: #{tpu_custom_call.1} parent=31 // pred_region
          %s493 = smul.u32 8, %s21
          %s495 = ssub.s32 2048, 2048
          %496 = vsyncadd %s486, %s495
          %s497 = smul.addr %s493, 2
          %s498 = smul.addr %s497, 128
          %s499 = scalar_lea.hbm %s3, %s498
          %s500 = sshll.u32 %s489, 4
          %s501 = int_to_ptr.vmem [resolvable:$true] %s500
          %506 = dma.vmem_to_hbm [thread:$0]  %s501, 2048, %s499, %s486, 256, 256, 16
        $region44: #{tpu_custom_call.1} parent=31 // pred_fallthru
          _
      $region32: #{tpu_custom_call.1} parent=5 // pred_fallthru
        _
      %p507 = scmp.le.s32.totalorder 2, %s16
      // Predicated region
      $region45: #{tpu_custom_call.1} parent=5 // pred_check
        %p508 = pneg %p507
      $region46: #{tpu_custom_call.1} parent=5 // pred_check_branch
        %510 = sbr.rel (%p508) target = $region48
      $region47: #{tpu_custom_call.1} parent=5 // pred_region
        %s511 = ssub.s32 %s16, 2
        // Predicated region
        $region49: #{tpu_custom_call.1} parent=47 // pred_check
          %p512 = pneg %p113
        $region50: #{tpu_custom_call.1} parent=47 // pred_check_branch
          %514 = sbr.rel (%p512) target = $region52
        $region51: #{tpu_custom_call.1} parent=47 // pred_region
          %s515 = sand.u32 %s98, 1
          %s516 = scalar_lea.sflag [#allocation4], %s515
          %s517 = sand.u32 %s98, 1
          %s518 = smul.addr %s517, 128
          %s519 = scalar_lea.vmem [#allocation7], %s518
          %520 = dma.done %s516, 2048
        $region52: #{tpu_custom_call.1} parent=47 // pred_fallthru
          _
      $region48: #{tpu_custom_call.1} parent=5 // pred_fallthru
        _
    $region6: #{tpu_custom_call.1} parent=1 // loop_footer
      %s20 = sadd.s32 1, %s16
    $region7: #{tpu_custom_call.1} parent=1 // loop_footer_branch
      %15 = sbr.rel target = $region3
    $region8: #{tpu_custom_call.1} parent=1 // loop_exit
      _
    %521 = vsyncpa [#allocation3], 1
    %s522 = scalar_lea.sflag [#allocation3], 1
    %523 = vsyncpa %s522, 1
    %524 = vsyncpa [#allocation6], 1
    %525 = vsyncpa [#allocation4], 1
    %s526 = scalar_lea.sflag [#allocation4], 1
    %527 = vsyncpa %s526, 1

</llo_original>
